<compile_context>
chip_gen: v7x
topology: tpu7x:2x2x1
jax: 0.10.0
libtpu: 0.0.40
codegen_flags: <defaults>
</compile_context>

<pallas_src>
import functools

import jax
import jax.numpy as jnp
from jax.experimental import pallas as pl
from jax.experimental.pallas import tpu as pltpu

LANE = 128          # lane width: keep every layer's output dim a multiple of this
SUBLANE_BF16 = 16   # bf16 packs 16 rows per vreg sublane group


def _round_up(n, m):
    return ((n + m - 1) // m) * m


def mlp_kernel(x_ref, w1_ref, b1_ref, w2_ref, b2_ref, w3_ref, b3_ref, o_ref):
    # x_ref: (TB, 192) bf16.  Weights: bf16, lane-dense (padded to 128 cols).
    # Biases: f32 (1, 128).  All accumulation / bias-add / ReLU in f32.
    x = x_ref[...]
    h1 = jnp.dot(x, w1_ref[...], preferred_element_type=jnp.float32)
    h1 = jnp.maximum(h1 + b1_ref[...], 0.0)                       # (TB, 128) f32
    h2 = jnp.dot(h1.astype(w2_ref.dtype), w2_ref[...],
                 preferred_element_type=jnp.float32)
    h2 = jnp.maximum(h2 + b2_ref[...], 0.0)                       # (TB, 128) f32
    y = jnp.dot(h2.astype(w3_ref.dtype), w3_ref[...],
                preferred_element_type=jnp.float32) + b3_ref[...]
    o_ref[...] = y.astype(o_ref.dtype)                            # (TB, 128) f32


@functools.partial(jax.jit, static_argnames=("block_b",))
def custom_mlp_forward(x, w1, b1, w2, b2, w3, b3, *, block_b=1024):
    """x: (B, contextLength, input_dim) f32 -> (B, predictLength) f32."""
    B = x.shape[0]
    x_flat = x.reshape(B, -1)                   # nn.Flatten (row-major, like torch)
    in_dim = x_flat.shape[1]                    # 192 (full dim -> valid block dim)
    h2_dim = w2.shape[1]                        # 64
    n_out = w3.shape[1]                         # 24

    # --- lane-dense padding of layers 2/3 (zero cols/rows, negligible FLOPs) ---
    h2_p = _round_up(h2_dim, LANE)              # 128
    n_p = _round_up(n_out, LANE)                # 128
    w2_p = jnp.pad(w2, ((0, 0), (0, h2_p - h2_dim)))
    b2_p = jnp.pad(b2, ((0, 0), (0, h2_p - h2_dim)))
    w3_p = jnp.pad(w3, ((0, h2_p - h2_dim), (0, n_p - n_out)))
    b3_p = jnp.pad(b3, ((0, 0), (0, n_p - n_out)))

    # --- bf16 matmul operands, f32 biases ---
    x_bf = x_flat.astype(jnp.bfloat16)
    w1_bf = w1.astype(jnp.bfloat16)
    w2_bf = w2_p.astype(jnp.bfloat16)
    w3_bf = w3_p.astype(jnp.bfloat16)
    b1_f = b1.astype(jnp.float32)
    b2_f = b2_p.astype(jnp.float32)
    b3_f = b3_p.astype(jnp.float32)

    # --- batch tiling: biggest tile <= block_b, bf16-sublane aligned ---
    tb = min(block_b, _round_up(B, SUBLANE_BF16))
    b_pad = _round_up(B, tb)
    if b_pad != B:
        x_bf = jnp.pad(x_bf, ((0, b_pad - B), (0, 0)))

    grid = (b_pad // tb,)
    batch_spec = lambda last: pl.BlockSpec((tb, last), lambda i: (i, 0))
    resident = lambda a: pl.BlockSpec(a.shape, lambda i: (0, 0))  # DMA once

    out = pl.pallas_call(
        mlp_kernel,
        out_shape=jax.ShapeDtypeStruct((b_pad, n_p), jnp.float32),
        grid=grid,
        in_specs=[
            batch_spec(in_dim),
            resident(w1_bf), resident(b1_f),
            resident(w2_bf), resident(b2_f),
            resident(w3_bf), resident(b3_f),
        ],
        out_specs=batch_spec(n_p),
        compiler_params=pltpu.CompilerParams(
            dimension_semantics=("parallel",)),
    )(x_bf, w1_bf, b1_f, w2_bf, b2_f, w3_bf, b3_f)

    return out[:B, :n_out]


def init_params(key, input_dim, context_length=48, predict_length=24):
    in_dim = context_length * input_dim
    dims = [(in_dim, 128), (128, 64), (64, predict_length)]
    params = []
    for i, (fan_in, fan_out) in enumerate(dims):
        kw, kb, key = jax.random.split(jax.random.fold_in(key, i), 3)
        bound = 1.0 / jnp.sqrt(fan_in)
        # PyTorch nn.Linear default init: U(-1/sqrt(fan_in), 1/sqrt(fan_in)).
        # Stored as (in_features, out_features) so y = x @ W + b == x @ W_pt.T + b_pt.
        w = jax.random.uniform(kw, (fan_in, fan_out), jnp.float32, -bound, bound)
        b = jax.random.uniform(kb, (1, fan_out), jnp.float32, -bound, bound)
        params += [w, b]
    return params


def reference_forward(x, w1, b1, w2, b2, w3, b3):
    x_flat = x.reshape(x.shape[0], -1)
    h1 = jnp.maximum(x_flat @ w1 + b1, 0.0)
    h2 = jnp.maximum(h1 @ w2 + b2, 0.0)
    return h2 @ w3 + b3


if __name__ == "__main__":
    key = jax.random.PRNGKey(0)
    input_dim, context_length, predict_length = 4, 48, 24

    kx, kp = jax.random.split(key)
    w1, b1, w2, b2, w3, b3 = init_params(kp, input_dim, context_length, predict_length)

    # Small demo batch (single tile).
    batch = 8
    x = jax.random.normal(kx, (batch, context_length, input_dim), jnp.float32)
    y = jax.block_until_ready(custom_mlp_forward(x, w1, b1, w2, b2, w3, b3))
    y_ref = reference_forward(x, w1, b1, w2, b2, w3, b3)
    assert y.shape == (batch, predict_length)
    # bf16 matmul inputs -> compare against f32 reference with bf16-level tolerance.
    assert jnp.allclose(y, y_ref, atol=2e-2, rtol=2e-2)

    # Non-multiple batch with a small tile: exercises multi-step grid + padding path.
    batch2 = 300
    x2 = jax.random.normal(jax.random.fold_in(kx, 1),
                           (batch2, context_length, input_dim), jnp.float32)
    y2 = jax.block_until_ready(
        custom_mlp_forward(x2, w1, b1, w2, b2, w3, b3, block_b=128))
    y2_ref = reference_forward(x2, w1, b1, w2, b2, w3, b3)
    assert y2.shape == (batch2, predict_length)
    assert jnp.allclose(y2, y2_ref, atol=2e-2, rtol=2e-2)

    print("KERNEL_OK")
</pallas_src>

<mosaic_0001>
module attributes {stable_mosaic.version = 11 : i64} {
  func.func @mlp_kernel(%arg0: i32, %arg1: memref<16x192xbf16, #tpu.memory_space<vmem>>, %arg2: memref<192x128xbf16, #tpu.memory_space<vmem>>, %arg3: memref<1x128xf32, #tpu.memory_space<vmem>>, %arg4: memref<128x128xbf16, #tpu.memory_space<vmem>>, %arg5: memref<1x128xf32, #tpu.memory_space<vmem>>, %arg6: memref<128x128xbf16, #tpu.memory_space<vmem>>, %arg7: memref<1x128xf32, #tpu.memory_space<vmem>>, %arg8: memref<16x128xf32, #tpu.memory_space<vmem>>) attributes {dimension_semantics = [#tpu.dimension_semantics<parallel>], iteration_bounds = array<i64: 1>, scalar_prefetch = 0 : i64, scratch_operands = 0 : i64, tpu.core_type = #tpu.core_type<tc>, window_params = [{transform_indices = @transform_0, window_bounds = array<i64: 16, 192>}, {pipeline_mode = #tpu.pipeline_mode<synchronous>, transform_indices = @transform_1, window_bounds = array<i64: 192, 128>}, {pipeline_mode = #tpu.pipeline_mode<synchronous>, transform_indices = @transform_2, window_bounds = array<i64: 1, 128>}, {pipeline_mode = #tpu.pipeline_mode<synchronous>, transform_indices = @transform_3, window_bounds = array<i64: 128, 128>}, {pipeline_mode = #tpu.pipeline_mode<synchronous>, transform_indices = @transform_4, window_bounds = array<i64: 1, 128>}, {pipeline_mode = #tpu.pipeline_mode<synchronous>, transform_indices = @transform_5, window_bounds = array<i64: 128, 128>}, {pipeline_mode = #tpu.pipeline_mode<synchronous>, transform_indices = @transform_6, window_bounds = array<i64: 1, 128>}, {transform_indices = @transform_7, window_bounds = array<i64: 16, 128>}]} {
    %c0 = arith.constant 0 : index
    %c0_0 = arith.constant 0 : index
    %0 = vector.load %arg1[%c0, %c0_0] : memref<16x192xbf16, #tpu.memory_space<vmem>>, vector<16x192xbf16>
    %c0_1 = arith.constant 0 : index
    %c0_2 = arith.constant 0 : index
    %1 = vector.load %arg2[%c0_1, %c0_2] : memref<192x128xbf16, #tpu.memory_space<vmem>>, vector<192x128xbf16>
    %cst = arith.constant dense<0.000000e+00> : vector<16x128xf32>
    %2 = tpu.matmul %0, %1, %cst {dimension_numbers = #tpu.dot_dimension_numbers<[1], [0], [0], [1], [0, 0, 1, 1], [], []>} : vector<16x192xbf16>, vector<192x128xbf16>, vector<16x128xf32> -> vector<16x128xf32>
    %c0_3 = arith.constant 0 : index
    %c0_4 = arith.constant 0 : index
    %3 = vector.load %arg3[%c0_3, %c0_4] : memref<1x128xf32, #tpu.memory_space<vmem>>, vector<1x128xf32>
    %4 = vector.broadcast %3 : vector<1x128xf32> to vector<16x128xf32>
    %5 = arith.addf %2, %4 : vector<16x128xf32>
    %cst_5 = arith.constant 0.000000e+00 : f32
    %6 = vector.broadcast %cst_5 : f32 to vector<16x128xf32>
    %7 = arith.maximumf %5, %6 : vector<16x128xf32>
    %8 = arith.truncf %7 : vector<16x128xf32> to vector<16x128xbf16>
    %c0_6 = arith.constant 0 : index
    %c0_7 = arith.constant 0 : index
    %9 = vector.load %arg4[%c0_6, %c0_7] : memref<128x128xbf16, #tpu.memory_space<vmem>>, vector<128x128xbf16>
    %cst_8 = arith.constant dense<0.000000e+00> : vector<16x128xf32>
    %10 = tpu.matmul %8, %9, %cst_8 {dimension_numbers = #tpu.dot_dimension_numbers<[1], [0], [0], [1], [0, 0, 1, 1], [], []>} : vector<16x128xbf16>, vector<128x128xbf16>, vector<16x128xf32> -> vector<16x128xf32>
    %c0_9 = arith.constant 0 : index
    %c0_10 = arith.constant 0 : index
    %11 = vector.load %arg5[%c0_9, %c0_10] : memref<1x128xf32, #tpu.memory_space<vmem>>, vector<1x128xf32>
    %12 = vector.broadcast %11 : vector<1x128xf32> to vector<16x128xf32>
    %13 = arith.addf %10, %12 : vector<16x128xf32>
    %cst_11 = arith.constant 0.000000e+00 : f32
    %14 = vector.broadcast %cst_11 : f32 to vector<16x128xf32>
    %15 = arith.maximumf %13, %14 : vector<16x128xf32>
    %16 = arith.truncf %15 : vector<16x128xf32> to vector<16x128xbf16>
    %c0_12 = arith.constant 0 : index
    %c0_13 = arith.constant 0 : index
    %17 = vector.load %arg6[%c0_12, %c0_13] : memref<128x128xbf16, #tpu.memory_space<vmem>>, vector<128x128xbf16>
    %cst_14 = arith.constant dense<0.000000e+00> : vector<16x128xf32>
    %18 = tpu.matmul %16, %17, %cst_14 {dimension_numbers = #tpu.dot_dimension_numbers<[1], [0], [0], [1], [0, 0, 1, 1], [], []>} : vector<16x128xbf16>, vector<128x128xbf16>, vector<16x128xf32> -> vector<16x128xf32>
    %c0_15 = arith.constant 0 : index
    %c0_16 = arith.constant 0 : index
    %19 = vector.load %arg7[%c0_15, %c0_16] : memref<1x128xf32, #tpu.memory_space<vmem>>, vector<1x128xf32>
    %20 = vector.broadcast %19 : vector<1x128xf32> to vector<16x128xf32>
    %21 = arith.addf %18, %20 : vector<16x128xf32>
    %c0_17 = arith.constant 0 : index
    %c0_18 = arith.constant 0 : index
    %22 = vector.load %arg8[%c0_17, %c0_18] : memref<16x128xf32, #tpu.memory_space<vmem>>, vector<16x128xf32>
    tpu.vector_store %arg8[%c0_17, %c0_18], %21 {strides = array<i32>} : memref<16x128xf32, #tpu.memory_space<vmem>>, vector<16x128xf32>,
    return
  }
  func.func @transform_0(%arg0: i32) -> (i32, i32) {
    %c0_i32 = arith.constant 0 : i32
    %c0_i32_0 = arith.constant 0 : i32
    return %arg0, %c0_i32 : i32, i32
  }
  func.func @transform_1(%arg0: i32) -> (i32, i32) {
    %c0_i32 = arith.constant 0 : i32
    %c0_i32_0 = arith.constant 0 : i32
    %c0_i32_1 = arith.constant 0 : i32
    return %c0_i32, %c0_i32_0 : i32, i32
  }
  func.func @transform_2(%arg0: i32) -> (i32, i32) {
    %c0_i32 = arith.constant 0 : i32
    %c0_i32_0 = arith.constant 0 : i32
    %c0_i32_1 = arith.constant 0 : i32
    return %c0_i32, %c0_i32_0 : i32, i32
  }
  func.func @transform_3(%arg0: i32) -> (i32, i32) {
    %c0_i32 = arith.constant 0 : i32
    %c0_i32_0 = arith.constant 0 : i32
    %c0_i32_1 = arith.constant 0 : i32
    return %c0_i32, %c0_i32_0 : i32, i32
  }
  func.func @transform_4(%arg0: i32) -> (i32, i32) {
    %c0_i32 = arith.constant 0 : i32
    %c0_i32_0 = arith.constant 0 : i32
    %c0_i32_1 = arith.constant 0 : i32
    return %c0_i32, %c0_i32_0 : i32, i32
  }
  func.func @transform_5(%arg0: i32) -> (i32, i32) {
    %c0_i32 = arith.constant 0 : i32
    %c0_i32_0 = arith.constant 0 : i32
    %c0_i32_1 = arith.constant 0 : i32
    return %c0_i32, %c0_i32_0 : i32, i32
  }
  func.func @transform_6(%arg0: i32) -> (i32, i32) {
    %c0_i32 = arith.constant 0 : i32
    %c0_i32_0 = arith.constant 0 : i32
    %c0_i32_1 = arith.constant 0 : i32
    return %c0_i32, %c0_i32_0 : i32, i32
  }
  func.func @transform_7(%arg0: i32) -> (i32, i32) {
    %c0_i32 = arith.constant 0 : i32
    %c0_i32_0 = arith.constant 0 : i32
    return %arg0, %c0_i32 : i32, i32
  }
}

</mosaic_0001>

<llo_original>
// kernel: custom_mlp_forward.1
$region0: #{custom_mlp_forward.1}
  #allocation0 [shape = 'u32[]', space=smem, size = 0x4, offset = 0x4, fixed_abs, tag = 'smem constant byte address 0x4 - core index']
  #allocation1 [shape = 'u32[144,128]{1,0:T(1,128)}', space=vmem, size = 0x12000, scoped, tag = 'internal scratch']
  %s0 = inlined_call_operand.vmem [shape: bf16[16,192], index: 0, kind: input, shape index: {}]
  %s1 = inlined_call_operand.vmem [shape: bf16[192,128], index: 1, kind: input, shape index: {}]
  %s2 = inlined_call_operand.vmem [shape: f32[1,128], index: 2, kind: input, shape index: {}]
  %s3 = inlined_call_operand.vmem [shape: bf16[128,128], index: 3, kind: input, shape index: {}]
  %s4 = inlined_call_operand.vmem [shape: f32[1,128], index: 4, kind: input, shape index: {}]
  %s5 = inlined_call_operand.vmem [shape: bf16[128,128], index: 5, kind: input, shape index: {}]
  %s6 = inlined_call_operand.vmem [shape: f32[1,128], index: 6, kind: input, shape index: {}]
  %s7 = inlined_call_operand.vmem [shape: f32[16,128], index: 7, kind: output, shape index: {}]
  %s8 = sld [smem:[#allocation0]]
  $region38: #{custom_mlp_forward.1} parent=0
    _
  %s10 = ssub.s32 1, %s8
  %s11 = scalar_select 0, %s10, %s8
  // Predicated region
  $region2: #{custom_mlp_forward.1} parent=0 // pred_check
    _
  $region3: #{custom_mlp_forward.1} parent=0 // pred_check_branch
    %13 = sbr.rel (0) target = $region5
  $region4: #{custom_mlp_forward.1} parent=0 // pred_region
    _
  $region5: #{custom_mlp_forward.1} parent=0 // pred_fallthru
    _
  // Predicated region
  $region6: #{custom_mlp_forward.1} parent=0 // pred_check
    _
  $region7: #{custom_mlp_forward.1} parent=0 // pred_check_branch
    %15 = sbr.rel (0) target = $region9
  $region8: #{custom_mlp_forward.1} parent=0 // pred_region
    _
  $region9: #{custom_mlp_forward.1} parent=0 // pred_fallthru
    _
  // Predicated region
  $region10: #{custom_mlp_forward.1} parent=0 // pred_check
    _
  $region11: #{custom_mlp_forward.1} parent=0 // pred_check_branch
    %17 = sbr.rel (0) target = $region13
  $region12: #{custom_mlp_forward.1} parent=0 // pred_region
    _
  $region13: #{custom_mlp_forward.1} parent=0 // pred_fallthru
    _
  // Predicated region
  $region14: #{custom_mlp_forward.1} parent=0 // pred_check
    _
  $region15: #{custom_mlp_forward.1} parent=0 // pred_check_branch
    %19 = sbr.rel (0) target = $region17
  $region16: #{custom_mlp_forward.1} parent=0 // pred_region
    _
  $region17: #{custom_mlp_forward.1} parent=0 // pred_fallthru
    _
  // Predicated region
  $region18: #{custom_mlp_forward.1} parent=0 // pred_check
    _
  $region19: #{custom_mlp_forward.1} parent=0 // pred_check_branch
    %21 = sbr.rel (0) target = $region21
  $region20: #{custom_mlp_forward.1} parent=0 // pred_region
    _
  $region21: #{custom_mlp_forward.1} parent=0 // pred_fallthru
    _
  // Predicated region
  $region22: #{custom_mlp_forward.1} parent=0 // pred_check
    _
  $region23: #{custom_mlp_forward.1} parent=0 // pred_check_branch
    %23 = sbr.rel (0) target = $region25
  $region24: #{custom_mlp_forward.1} parent=0 // pred_region
    _
  $region25: #{custom_mlp_forward.1} parent=0 // pred_fallthru
    _
  // Predicated region
  $region26: #{custom_mlp_forward.1} parent=0 // pred_check
    _
  $region27: #{custom_mlp_forward.1} parent=0 // pred_check_branch
    %25 = sbr.rel (0) target = $region29
  $region28: #{custom_mlp_forward.1} parent=0 // pred_region
    _
  $region29: #{custom_mlp_forward.1} parent=0 // pred_fallthru
    _
  %v27 = vld [vmem:[%s0] sm:$0xff]
  %v28 = vld [vmem:[%s0 + $0x8] sm:$0xff]
  %v29 = vld [vmem:[%s1] sm:$0xf]
  %v30 = vld [vmem:[%s1 + $0x4] sm:$0xf]
  %v31 = vld [vmem:[%s1 + $0x8] sm:$0xf]
  %v32 = vld [vmem:[%s1 + $0xc] sm:$0xf]
  %v33 = vld [vmem:[%s1 + $0x10] sm:$0xf]
  %v34 = vld [vmem:[%s1 + $0x14] sm:$0xf]
  %v35 = vld [vmem:[%s1 + $0x18] sm:$0xf]
  %v36 = vld [vmem:[%s1 + $0x1c] sm:$0xf]
  %v37 = vld [vmem:[%s1 + $0x20] sm:$0xf]
  %v38 = vld [vmem:[%s1 + $0x24] sm:$0xf]
  %v39 = vld [vmem:[%s1 + $0x28] sm:$0xf]
  %v40 = vld [vmem:[%s1 + $0x2c] sm:$0xf]
  %v41 = vld [vmem:[%s1 + $0x30] sm:$0xf]
  %v42 = vld [vmem:[%s1 + $0x34] sm:$0xf]
  %v43 = vld [vmem:[%s1 + $0x38] sm:$0xf]
  %v44 = vld [vmem:[%s1 + $0x3c] sm:$0xf]
  %v45 = vld [vmem:[%s1 + $0x40] sm:$0xf]
  %v46 = vld [vmem:[%s1 + $0x44] sm:$0xf]
  %v47 = vld [vmem:[%s1 + $0x48] sm:$0xf]
  %v48 = vld [vmem:[%s1 + $0x4c] sm:$0xf]
  %v49 = vld [vmem:[%s1 + $0x50] sm:$0xf]
  %v50 = vld [vmem:[%s1 + $0x54] sm:$0xf]
  %v51 = vld [vmem:[%s1 + $0x58] sm:$0xf]
  %v52 = vld [vmem:[%s1 + $0x5c] sm:$0xf]
  %v53 = vld [vmem:[%s2] sm:$0x1]
  %v55 = vlaneseq
  %v56 = vshrl.u32 %v55, 7
  %v57 = vsub.s32 0, %v56
  %v58 = vrot.slane %v53, %v57
  %v62 = vunpack.c.l.b16 %v27
  %v63 = vunpack.c.h.b16 %v27
  %v64 = vunpack.c.l.b16 %v28
  %v65 = vunpack.c.h.b16 %v28
  %v66 = vpack.c.b16 %v64, %v62
  %v67 = vpack.c.b16 %v65, %v63
  %v93 = vunpack.c.l.b16 %v29
  %v94 = vunpack.c.l.b16 %v30
  %v95 = vunpack.c.l.b16 %v31
  %v96 = vunpack.c.l.b16 %v32
  %v97 = vunpack.c.l.b16 %v33
  %v98 = vunpack.c.l.b16 %v34
  %v99 = vunpack.c.l.b16 %v35
  %v100 = vunpack.c.l.b16 %v36
  %v101 = vunpack.c.l.b16 %v37
  %v102 = vunpack.c.l.b16 %v38
  %v103 = vunpack.c.l.b16 %v39
  %v104 = vunpack.c.l.b16 %v40
  %v105 = vunpack.c.l.b16 %v41
  %v106 = vunpack.c.l.b16 %v42
  %v107 = vunpack.c.l.b16 %v43
  %v108 = vunpack.c.l.b16 %v44
  %v109 = vunpack.c.l.b16 %v45
  %v110 = vunpack.c.l.b16 %v46
  %v111 = vunpack.c.l.b16 %v47
  %v112 = vunpack.c.l.b16 %v48
  %v113 = vunpack.c.l.b16 %v49
  %v114 = vunpack.c.l.b16 %v50
  %v115 = vunpack.c.l.b16 %v51
  %v116 = vunpack.c.l.b16 %v52
  %v117 = vpack.c.b16 %v94, %v93
  %v118 = vpack.c.b16 %v96, %v95
  %v119 = vpack.c.b16 %v98, %v97
  %v120 = vpack.c.b16 %v100, %v99
  %v121 = vpack.c.b16 %v102, %v101
  %v122 = vpack.c.b16 %v104, %v103
  %v123 = vpack.c.b16 %v106, %v105
  %v124 = vpack.c.b16 %v108, %v107
  %v125 = vpack.c.b16 %v110, %v109
  %v126 = vpack.c.b16 %v112, %v111
  %v127 = vpack.c.b16 %v114, %v113
  %v128 = vpack.c.b16 %v116, %v115
  %vm141 = vcmask 523264
  %v143 = vsel %vm141, %v67, 0
  %145 = vmatprep.subr.bf16.mxu0 0
  %146 = vmatpush1.bf16.msra.mxu0 %v117
  %147 = vmatprep.subr.bf16.mxu0 0
  %148 = vmatpush1.bf16.msra.mxu0 %v118
  %149 = vmatprep.subr.bf16.mxu0 0
  %150 = vmatpush1.bf16.msra.mxu0 %v119
  %151 = vmatprep.subr.bf16.mxu0 0
  %152 = vmatpush1.bf16.msra.mxu0 %v120
  %153 = vmatprep.subr.bf16.mxu0 0
  %154 = vmatpush1.bf16.msra.mxu0 %v121
  %155 = vmatprep.subr.bf16.mxu0 0
  %156 = vmatpush1.bf16.msra.mxu0 %v122
  %157 = vmatprep.subr.bf16.mxu0 0
  %158 = vmatpush1.bf16.msra.mxu0 %v123
  %159 = vmatprep.subr.bf16.mxu0 0
  %160 = vmatpush1.bf16.msra.mxu0 %v124
  %161 = vmatprep.subr.bf16.mxu0 0
  %162 = vmatpush1.bf16.msra.mxu0 %v125
  %163 = vmatprep.subr.bf16.mxu0 0
  %164 = vmatpush1.bf16.msra.mxu0 %v126
  %165 = vmatprep.subr.bf16.mxu0 0
  %166 = vmatpush1.bf16.msra.mxu0 %v127
  %167 = vmatprep.subr.bf16.mxu0 0
  %168 = vmatpush1.bf16.msra.mxu0 %v128
  %169 = vmatprep.subr.bf16.mxu0 0
  %170 = vmatpush1.bf16.msra.mxu0 0
  %171 = vmatprep.subr.bf16.mxu0 0
  %172 = vmatpush1.bf16.msra.mxu0 0
  %173 = vmatprep.subr.bf16.mxu0 0
  %174 = vmatpush1.bf16.msra.mxu0 0
  %175 = vmatprep.subr.bf16.mxu0 0
  %176 = vmatpush1.bf16.msra.mxu0 0
  %177 = vmatprep.mubr.bf16.mxu0 %v143
  %178 = vmatmul.mubr.bf16.gmra.mrb[0].mxu0 %v66
  %v179 = vpop.f32.mrb[0].mxu0
  %v180 = vadd.f32 %v58, %v179
  %v181 = vpop.f32.mrb[0].mxu0
  %v182 = vpop.f32.mrb[0].mxu0
  %v183 = vadd.f32 %v58, %v182
  %v184 = vpop.f32.mrb[0].mxu0
  %185 = vdwg.mxu0
  %v186 = vmax.f32 %v180, 0.0
  %v187 = vmax.f32 %v183, 0.0
  %v188 = vpack.c.bf16 %v187, %v186
  %v189 = vld [vmem:[%s3] sm:$0xf]
  %v190 = vld [vmem:[%s3 + $0x4] sm:$0xf]
  %v191 = vld [vmem:[%s3 + $0x8] sm:$0xf]
  %v192 = vld [vmem:[%s3 + $0xc] sm:$0xf]
  %v193 = vld [vmem:[%s3 + $0x10] sm:$0xf]
  %v194 = vld [vmem:[%s3 + $0x14] sm:$0xf]
  %v195 = vld [vmem:[%s3 + $0x18] sm:$0xf]
  %v196 = vld [vmem:[%s3 + $0x1c] sm:$0xf]
  %v197 = vld [vmem:[%s3 + $0x20] sm:$0xf]
  %v198 = vld [vmem:[%s3 + $0x24] sm:$0xf]
  %v199 = vld [vmem:[%s3 + $0x28] sm:$0xf]
  %v200 = vld [vmem:[%s3 + $0x2c] sm:$0xf]
  %v201 = vld [vmem:[%s3 + $0x30] sm:$0xf]
  %v202 = vld [vmem:[%s3 + $0x34] sm:$0xf]
  %v203 = vld [vmem:[%s3 + $0x38] sm:$0xf]
  %v204 = vld [vmem:[%s3 + $0x3c] sm:$0xf]
  %v205 = vld [vmem:[%s4] sm:$0x1]
  %v207 = vlaneseq
  %v208 = vshrl.u32 %v207, 7
  %v209 = vsub.s32 0, %v208
  %v210 = vrot.slane %v205, %v209
  %v228 = vunpack.c.l.b16 %v189
  %v229 = vunpack.c.l.b16 %v190
  %v230 = vunpack.c.l.b16 %v191
  %v231 = vunpack.c.l.b16 %v192
  %v232 = vunpack.c.l.b16 %v193
  %v233 = vunpack.c.l.b16 %v194
  %v234 = vunpack.c.l.b16 %v195
  %v235 = vunpack.c.l.b16 %v196
  %v236 = vunpack.c.l.b16 %v197
  %v237 = vunpack.c.l.b16 %v198
  %v238 = vunpack.c.l.b16 %v199
  %v239 = vunpack.c.l.b16 %v200
  %v240 = vunpack.c.l.b16 %v201
  %v241 = vunpack.c.l.b16 %v202
  %v242 = vunpack.c.l.b16 %v203
  %v243 = vunpack.c.l.b16 %v204
  %v244 = vpack.c.b16 %v229, %v228
  %v245 = vpack.c.b16 %v231, %v230
  %v246 = vpack.c.b16 %v233, %v232
  %v247 = vpack.c.b16 %v235, %v234
  %v248 = vpack.c.b16 %v237, %v236
  %v249 = vpack.c.b16 %v239, %v238
  %v250 = vpack.c.b16 %v241, %v240
  %v251 = vpack.c.b16 %v243, %v242
  %260 = vmatprep.subr.bf16.mxu0 0
  %261 = vmatpush1.bf16.msra.mxu0 %v244
  %262 = vmatprep.subr.bf16.mxu0 0
  %263 = vmatpush1.bf16.msra.mxu0 %v245
  %264 = vmatprep.subr.bf16.mxu0 0
  %265 = vmatpush1.bf16.msra.mxu0 %v246
  %266 = vmatprep.subr.bf16.mxu0 0
  %267 = vmatpush1.bf16.msra.mxu0 %v247
  %268 = vmatprep.subr.bf16.mxu0 0
  %269 = vmatpush1.bf16.msra.mxu0 %v248
  %270 = vmatprep.subr.bf16.mxu0 0
  %271 = vmatpush1.bf16.msra.mxu0 %v249
  %272 = vmatprep.subr.bf16.mxu0 0
  %273 = vmatpush1.bf16.msra.mxu0 %v250
  %274 = vmatprep.subr.bf16.mxu0 0
  %275 = vmatpush1.bf16.msra.mxu0 %v251
  %276 = vmatprep.subr.bf16.mxu0 0
  %277 = vmatpush1.bf16.msra.mxu0 0
  %278 = vmatprep.subr.bf16.mxu0 0
  %279 = vmatpush1.bf16.msra.mxu0 0
  %280 = vmatprep.subr.bf16.mxu0 0
  %281 = vmatpush1.bf16.msra.mxu0 0
  %282 = vmatprep.subr.bf16.mxu0 0
  %283 = vmatpush1.bf16.msra.mxu0 0
  %284 = vmatprep.subr.bf16.mxu0 0
  %285 = vmatpush1.bf16.msra.mxu0 0
  %286 = vmatprep.subr.bf16.mxu0 0
  %287 = vmatpush1.bf16.msra.mxu0 0
  %288 = vmatprep.subr.bf16.mxu0 0
  %289 = vmatpush1.bf16.msra.mxu0 0
  %290 = vmatprep.subr.bf16.mxu0 0
  %291 = vmatpush1.bf16.msra.mxu0 0
  %292 = vmatprep.mubr.bf16.mxu0 0
  %293 = vmatmul.mubr.bf16.gmra.mrb[0].mxu0 %v188
  %v294 = vpop.f32.mrb[0].mxu0
  %v295 = vadd.f32 %v210, %v294
  %v296 = vpop.f32.mrb[0].mxu0
  %v297 = vpop.f32.mrb[0].mxu0
  %v298 = vadd.f32 %v210, %v297
  %v299 = vpop.f32.mrb[0].mxu0
  %300 = vdwg.mxu0
  %v301 = vmax.f32 %v295, 0.0
  %v302 = vmax.f32 %v298, 0.0
  %v303 = vpack.c.bf16 %v302, %v301
  %v304 = vld [vmem:[%s5] sm:$0xf]
  %v305 = vld [vmem:[%s5 + $0x4] sm:$0xf]
  %v306 = vld [vmem:[%s5 + $0x8] sm:$0xf]
  %v307 = vld [vmem:[%s5 + $0xc] sm:$0xf]
  %v308 = vld [vmem:[%s5 + $0x10] sm:$0xf]
  %v309 = vld [vmem:[%s5 + $0x14] sm:$0xf]
  %v310 = vld [vmem:[%s5 + $0x18] sm:$0xf]
  %v311 = vld [vmem:[%s5 + $0x1c] sm:$0xf]
  %v312 = vld [vmem:[%s5 + $0x20] sm:$0xf]
  %v313 = vld [vmem:[%s5 + $0x24] sm:$0xf]
  %v314 = vld [vmem:[%s5 + $0x28] sm:$0xf]
  %v315 = vld [vmem:[%s5 + $0x2c] sm:$0xf]
  %v316 = vld [vmem:[%s5 + $0x30] sm:$0xf]
  %v317 = vld [vmem:[%s5 + $0x34] sm:$0xf]
  %v318 = vld [vmem:[%s5 + $0x38] sm:$0xf]
  %v319 = vld [vmem:[%s5 + $0x3c] sm:$0xf]
  %v320 = vld [vmem:[%s6] sm:$0x1]
  %v322 = vlaneseq
  %v323 = vshrl.u32 %v322, 7
  %v324 = vsub.s32 0, %v323
  %v325 = vrot.slane %v320, %v324
  %v343 = vunpack.c.l.b16 %v304
  %v344 = vunpack.c.l.b16 %v305
  %v345 = vunpack.c.l.b16 %v306
  %v346 = vunpack.c.l.b16 %v307
  %v347 = vunpack.c.l.b16 %v308
  %v348 = vunpack.c.l.b16 %v309
  %v349 = vunpack.c.l.b16 %v310
  %v350 = vunpack.c.l.b16 %v311
  %v351 = vunpack.c.l.b16 %v312
  %v352 = vunpack.c.l.b16 %v313
  %v353 = vunpack.c.l.b16 %v314
  %v354 = vunpack.c.l.b16 %v315
  %v355 = vunpack.c.l.b16 %v316
  %v356 = vunpack.c.l.b16 %v317
  %v357 = vunpack.c.l.b16 %v318
  %v358 = vunpack.c.l.b16 %v319
  %v359 = vpack.c.b16 %v344, %v343
  %v360 = vpack.c.b16 %v346, %v345
  %v361 = vpack.c.b16 %v348, %v347
  %v362 = vpack.c.b16 %v350, %v349
  %v363 = vpack.c.b16 %v352, %v351
  %v364 = vpack.c.b16 %v354, %v353
  %v365 = vpack.c.b16 %v356, %v355
  %v366 = vpack.c.b16 %v358, %v357
  %375 = vmatprep.subr.bf16.mxu0 0
  %376 = vmatpush1.bf16.msra.mxu0 %v359
  %377 = vmatprep.subr.bf16.mxu0 0
  %378 = vmatpush1.bf16.msra.mxu0 %v360
  %379 = vmatprep.subr.bf16.mxu0 0
  %380 = vmatpush1.bf16.msra.mxu0 %v361
  %381 = vmatprep.subr.bf16.mxu0 0
  %382 = vmatpush1.bf16.msra.mxu0 %v362
  %383 = vmatprep.subr.bf16.mxu0 0
  %384 = vmatpush1.bf16.msra.mxu0 %v363
  %385 = vmatprep.subr.bf16.mxu0 0
  %386 = vmatpush1.bf16.msra.mxu0 %v364
  %387 = vmatprep.subr.bf16.mxu0 0
  %388 = vmatpush1.bf16.msra.mxu0 %v365
  %389 = vmatprep.subr.bf16.mxu0 0
  %390 = vmatpush1.bf16.msra.mxu0 %v366
  %391 = vmatprep.subr.bf16.mxu0 0
  %392 = vmatpush1.bf16.msra.mxu0 0
  %393 = vmatprep.subr.bf16.mxu0 0
  %394 = vmatpush1.bf16.msra.mxu0 0
  %395 = vmatprep.subr.bf16.mxu0 0
  %396 = vmatpush1.bf16.msra.mxu0 0
  %397 = vmatprep.subr.bf16.mxu0 0
  %398 = vmatpush1.bf16.msra.mxu0 0
  %399 = vmatprep.subr.bf16.mxu0 0
  %400 = vmatpush1.bf16.msra.mxu0 0
  %401 = vmatprep.subr.bf16.mxu0 0
  %402 = vmatpush1.bf16.msra.mxu0 0
  %403 = vmatprep.subr.bf16.mxu0 0
  %404 = vmatpush1.bf16.msra.mxu0 0
  %405 = vmatprep.subr.bf16.mxu0 0
  %406 = vmatpush1.bf16.msra.mxu0 0
  %407 = vmatprep.mubr.bf16.mxu0 0
  %408 = vmatmul.mubr.bf16.gmra.mrb[0].mxu0 %v303
  %v409 = vpop.f32.mrb[0].mxu0
  %v410 = vadd.f32 %v325, %v409
  %v411 = vpop.f32.mrb[0].mxu0
  %v412 = vpop.f32.mrb[0].mxu0
  %v413 = vadd.f32 %v325, %v412
  %v414 = vpop.f32.mrb[0].mxu0
  %415 = vdwg.mxu0
  %416 = vst [vmem:[%s7] sm:$0xff] %v410
  %417 = vst [vmem:[%s7 + $0x8] sm:$0xff] %v413
  // Predicated region
  $region30: #{custom_mlp_forward.1} parent=0 // pred_check
    _
  $region31: #{custom_mlp_forward.1} parent=0 // pred_check_branch
    %419 = sbr.rel (0) target = $region33
  $region32: #{custom_mlp_forward.1} parent=0 // pred_region
    _
  $region33: #{custom_mlp_forward.1} parent=0 // pred_fallthru
    _
  // Predicated region
  $region34: #{custom_mlp_forward.1} parent=0 // pred_check
    _
  $region35: #{custom_mlp_forward.1} parent=0 // pred_check_branch
    %421 = sbr.rel (0) target = $region37
  $region36: #{custom_mlp_forward.1} parent=0 // pred_region
    _
  $region37: #{custom_mlp_forward.1} parent=0 // pred_fallthru
    _

</llo_original>
